<compile_context>
chip_gen: v5e
topology: v5e:2x2
jax: 0.10.0
libtpu: 0.0.40
codegen_flags: <defaults>
</compile_context>

<pallas_src>
import jax
import jax.numpy as jnp
import numpy as np
from jax.experimental import pallas as pl
from jax.experimental.pallas import tpu as pltpu


# ---------------------------------------------------------------------------
# Roll-convention probe (defensive: makes the kernel robust to either rotate
# sign convention of pltpu.roll on the installed backend)
# ---------------------------------------------------------------------------

_ROLL_SIGN = None


def _roll_sign():
    """Sign s such that pltpu.roll(a, (s*d) % L, axis=-1)[p] == a[(p+d) % L]."""
    global _ROLL_SIGN
    if _ROLL_SIGN is None:
        def probe(x_ref, o_ref):
            o_ref[...] = pltpu.roll(x_ref[...], 1, axis=1)

        x = jax.lax.broadcasted_iota(jnp.float32, (8, 128), 1)
        y = pl.pallas_call(
            probe, out_shape=jax.ShapeDtypeStruct((8, 128), jnp.float32))(x)
        # np.roll convention: y[0, 1] == x[0, 0] == 0 -> shift must be -d.
        _ROLL_SIGN = -1 if float(y[0, 1]) == 0.0 else +1
    return _ROLL_SIGN


# ---------------------------------------------------------------------------
# Fused hourglass kernel (one grid step = one image / one lane-folded group)
# ---------------------------------------------------------------------------

def _make_hourglass_kernel(n_levels, H, W, HW, L, roll_sign):
    log2w = W.bit_length() - 1

    def kernel(x_ref,
               s1_r, sh1_r, w1_r,
               s2_r, sh2_r, w2_r,
               s3_r, sh3_r, w3_r, b3_r,
               o_ref):
        bf16 = jnp.bfloat16

        def shifted(a, d):
            """shifted(a, d)[:, p] == a[:, (p + d) % L] (wrapped lanes are
            always masked / unselected by the caller)."""
            amt = (roll_sign * d) % L
            return a if amt == 0 else pltpu.roll(a, amt, axis=1)

        # -- per-level constants: traced once, reused by every resblock ------
        q = jax.lax.broadcasted_iota(jnp.int32, (1, L), 1) & (HW - 1)
        jpos = q & (W - 1)            # column inside the image
        ipos = q >> log2w             # row inside the image

        conv_mask_cache = {}

        def conv_masks(lvl):
            if lvl not in conv_mask_cache:
                jl, il = jpos >> lvl, ipos >> lvl
                wl, hl = W >> lvl, H >> lvl
                cl, cr = jl >= 1, jl < wl - 1       # left/right column exists
                rt, rbot = il >= 1, il < hl - 1     # top/bottom row exists
                conv_mask_cache[lvl] = {
                    (-1, -1): rt & cl, (-1, 0): rt,   (-1, 1): rt & cr,
                    (0, -1):  cl,      (0, 0): None,  (0, 1):  cr,
                    (1, -1):  rbot & cl, (1, 0): rbot, (1, 1): rbot & cr,
                }
            return conv_mask_cache[lvl]

        pool_mask_cache = {}

        def pool_masks(lvl):
            if lvl not in pool_mask_cache:
                jl, il = jpos >> lvl, ipos >> lvl
                pool_mask_cache[lvl] = ((jl & 1) == 0, (il & 1) == 0)
            return pool_mask_cache[lvl]

        # -- building blocks --------------------------------------------------
        def conv3x3(t, lvl, w_flat_t):
            # `t` is constant over 2^lvl x 2^lvl spatial blocks, so the 3x3
            # neighbourhood of the level-`lvl` grid sits at lane offsets of
            # +-2^lvl (cols) and +-2^lvl*W (rows).  9 lane rolls (XLU) with
            # hoisted border masks, one sublane concat, ONE K=9*cin MXU matmul.
            step = 1 << lvl
            masks = conv_masks(lvl)
            tb = t.astype(bf16)
            taps = []
            for sy in (-1, 0, 1):
                for sx in (-1, 0, 1):
                    tap = shifted(tb, step * (sy * W + sx))
                    m = masks[(sy, sx)]
                    if m is not None:
                        tap = jnp.where(m, tap, 0.0)
                    taps.append(tap)
            col = jnp.concatenate(taps, axis=0)              # (9*cin, L) bf16
            return jnp.dot(w_flat_t, col, preferred_element_type=jnp.float32)

        def pool2x2(h, lvl):
            # Exact 2x2/2 max pool of the level-`lvl` grid, kept block-
            # replicated at full lane resolution so the later nearest-2x
            # upsample is a plain add.  4 rolls (XLU) + 2 selects + 2 maxes.
            s = 1 << lvl
            jl_even, il_even = pool_masks(lvl)
            hpart = jnp.where(jl_even, shifted(h, s), shifted(h, -s))
            hp = jnp.maximum(h, hpart)
            vpart = jnp.where(il_even, shifted(hp, s * W), shifted(hp, -s * W))
            return jnp.maximum(hp, vpart)

        counter = [0]

        def resblock(h, lvl):
            # bn->relu->1x1 -> bn->relu->3x3 -> bn->relu->1x1 (+ identity skip)
            # conv biases b1/b2 are pre-folded into sh2/sh3 on the host.
            k = counter[0]
            counter[0] += 1
            t = jnp.maximum(h * s1_r[k] + sh1_r[k], 0.0)
            t = jnp.dot(w1_r[k], t.astype(bf16),
                        preferred_element_type=jnp.float32)
            t = jnp.maximum(t * s2_r[k] + sh2_r[k], 0.0)
            t = conv3x3(t, lvl, w2_r[k])
            t = jnp.maximum(t * s3_r[k] + sh3_r[k], 0.0)
            t = jnp.dot(w3_r[k], t.astype(bf16),
                        preferred_element_type=jnp.float32)
            return t + b3_r[k] + h        # inp_dim == out_dim -> identity skip

        def hourglass(h, lvl):
            up1 = resblock(h, lvl)
            pooled = pool2x2(h, lvl)
            low1 = resblock(pooled, lvl + 1)
            if lvl + 1 < n_levels:
                low2 = hourglass(low1, lvl + 1)
            else:
                low2 = resblock(low1, lvl + 1)
            low3 = resblock(low2, lvl + 1)
            # low3 is already block-replicated at full resolution, so the
            # nearest-2x upsample of the reference collapses to an add.
            return up1 + low3
            # TODO(synk): at production sizes (f=256, 64x64) stash per-level
            # up1 into explicit pltpu.VMEM scratch and re-derive the 64 MiB
            # v7x VMEM budget instead of keeping everything as live SSA values.

        x = x_ref[0].astype(jnp.float32)          # (C, L)
        o_ref[0] = hourglass(x, 0).astype(o_ref.dtype)

    return kernel


# ---------------------------------------------------------------------------
# Host-side parameter packing (transposed, bf16 weights, folded biases)
# ---------------------------------------------------------------------------

def stack_params(blocks):
    """Stack the 3n+1 identically-shaped resblocks into 10 resident slabs.

    Channel-on-sublane layout: weights stored transposed (cout, cin) in bf16
    (the MXU runs a bf16 pass anyway; accumulation stays f32).  The conv
    biases b1/b2 are folded into the following BN shift:
        relu((W x + b) * s + sh) == relu((W x) * s + (sh + b * s))
    """
    bf16 = jnp.bfloat16
    mid = blocks[0]["w1"].shape[1]

    s1 = jnp.stack([b["s1"] for b in blocks])
    sh1 = jnp.stack([b["sh1"] for b in blocks])
    s2 = jnp.stack([b["s2"] for b in blocks])
    sh2 = jnp.stack([b["sh2"] + b["b1"] * b["s2"] for b in blocks])
    s3 = jnp.stack([b["s3"] for b in blocks])
    sh3 = jnp.stack([b["sh3"] + b["b2"] * b["s3"] for b in blocks])
    b3 = jnp.stack([b["b3"] for b in blocks])
    w1t = jnp.stack([b["w1"].T for b in blocks]).astype(bf16)       # (nb, mid, C)
    w2t = jnp.stack([b["w2"].reshape(9 * mid, mid).T
                     for b in blocks]).astype(bf16)                 # (nb, mid, 9*mid)
    w3t = jnp.stack([b["w3"].T for b in blocks]).astype(bf16)       # (nb, C, mid)
    return [
        s1[:, :, None], sh1[:, :, None], w1t,
        s2[:, :, None], sh2[:, :, None], w2t,
        s3[:, :, None], sh3[:, :, None], w3t,
        b3[:, :, None],
    ]


# ---------------------------------------------------------------------------
# Wrapper: one pallas_call for the whole hourglass
# ---------------------------------------------------------------------------

def hourglass_pallas(blocks, x_nchw, n_levels, images_per_step=1):
    """Fused hourglass forward.  x_nchw: (N, C, H, W) -> (N, C, H, W)."""
    N, C, H, W = x_nchw.shape
    assert H % (1 << n_levels) == 0 and W % (1 << n_levels) == 0
    assert (W & (W - 1)) == 0 and (H & (H - 1)) == 0, "power-of-two H, W assumed"
    # TODO(synk): non-power-of-two spatial sizes need div/mod lane index math.
    assert N % images_per_step == 0
    bb = images_per_step            # >1 folds the batch along lanes (single-TC)
    HW = H * W
    L = bb * HW
    G = N // bb

    params = stack_params(blocks)

    # (N, C, H, W) -> (G, C, bb*HW): channels on sublanes, spatial (and folded
    # batch) on lanes.  Border masks in the kernel are periodic in HW, so the
    # lane-folded batch is exact.
    x2 = x_nchw.reshape(G, bb, C, HW).transpose(0, 2, 1, 3).reshape(G, C, L)

    def const_spec(a):
        nd = a.ndim
        return pl.BlockSpec(a.shape, lambda n, _nd=nd: (0,) * _nd)

    in_specs = [pl.BlockSpec((1, C, L), lambda n: (n, 0, 0))]
    in_specs += [const_spec(a) for a in params]

    kernel = _make_hourglass_kernel(n_levels, H, W, HW, L, _roll_sign())
    out = pl.pallas_call(
        kernel,
        out_shape=jax.ShapeDtypeStruct((G, C, L), x_nchw.dtype),
        grid=(G,),
        in_specs=in_specs,
        out_specs=pl.BlockSpec((1, C, L), lambda n: (n, 0, 0)),
        compiler_params=pltpu.CompilerParams(
            dimension_semantics=("parallel",)),
    )(x2, *params)
    return out.reshape(G, C, bb, HW).transpose(0, 2, 1, 3).reshape(N, C, H, W)


# ---------------------------------------------------------------------------
# Deterministic parameter init (inference-form BN folded into scale/shift)
# ---------------------------------------------------------------------------

def _bn_affine(key, c):
    k0, k1, k2, k3 = jax.random.split(key, 4)
    gamma = 1.0 + 0.1 * jax.random.normal(k0, (c,), jnp.float32)
    beta = 0.1 * jax.random.normal(k1, (c,), jnp.float32)
    mean = 0.1 * jax.random.normal(k2, (c,), jnp.float32)
    var = jnp.abs(1.0 + 0.1 * jax.random.normal(k3, (c,), jnp.float32))
    scale = gamma / jnp.sqrt(var + 1e-5)
    shift = beta - mean * scale
    return scale, shift


def init_resblock(key, inp, out):
    # increase=0 config -> inp == out for every block (identity skip).
    assert inp == out  # TODO(synk): pack the skip 1x1 conv for inp != out
    mid = out // 2
    ks = jax.random.split(key, 9)
    s1, sh1 = _bn_affine(ks[0], inp)
    s2, sh2 = _bn_affine(ks[1], mid)
    s3, sh3 = _bn_affine(ks[2], mid)
    return dict(
        s1=s1, sh1=sh1,
        w1=0.1 * jax.random.normal(ks[3], (inp, mid), jnp.float32),
        b1=0.05 * jax.random.normal(ks[4], (mid,), jnp.float32),
        s2=s2, sh2=sh2,
        w2=0.1 * jax.random.normal(ks[5], (3, 3, mid, mid), jnp.float32),
        b2=0.05 * jax.random.normal(ks[6], (mid,), jnp.float32),
        s3=s3, sh3=sh3,
        w3=0.1 * jax.random.normal(ks[7], (mid, out), jnp.float32),
        b3=0.05 * jax.random.normal(ks[8], (out,), jnp.float32),
    )


def init_blocks(key, n, f, increase=0):
    """Flat list of resblocks in traversal order: [up1, low1, *inner, low3]."""
    nf = f + increase
    k1, k2, k3, k4 = jax.random.split(key, 4)
    blocks = [init_resblock(k1, f, f), init_resblock(k2, f, nf)]
    if n > 1:
        blocks += init_blocks(k3, n - 1, nf, increase)
    else:
        blocks += [init_resblock(k3, nf, nf)]
    blocks += [init_resblock(k4, nf, f)]
    return blocks


# ---------------------------------------------------------------------------
# Pure-JAX reference (semantics check, NHWC, HIGHEST precision)
# ---------------------------------------------------------------------------

def ref_forward(blocks, x, n_levels):
    idx = [0]

    def conv1x1(x, w, b):
        return jnp.einsum("nhwc,co->nhwo", x, w,
                          precision=jax.lax.Precision.HIGHEST) + b

    def conv3x3(x, w, b):
        y = jax.lax.conv_general_dilated(
            x, w, (1, 1), "SAME",
            dimension_numbers=("NHWC", "HWIO", "NHWC"),
            precision=jax.lax.Precision.HIGHEST)
        return y + b

    def rb(x):
        p = blocks[idx[0]]
        idx[0] += 1
        t = conv1x1(jax.nn.relu(x * p["s1"] + p["sh1"]), p["w1"], p["b1"])
        t = conv3x3(jax.nn.relu(t * p["s2"] + p["sh2"]), p["w2"], p["b2"])
        t = conv1x1(jax.nn.relu(t * p["s3"] + p["sh3"]), p["w3"], p["b3"])
        return t + x

    def hg(x, n):
        up1 = rb(x)
        N, H, W, C = x.shape
        pool = x.reshape(N, H // 2, 2, W // 2, 2, C).max(axis=(2, 4))
        low1 = rb(pool)
        low2 = hg(low1, n - 1) if n > 1 else rb(low1)
        low3 = rb(low2)
        up2 = jnp.repeat(jnp.repeat(low3, 2, axis=1), 2, axis=2)
        return up1 + up2

    return hg(x, n_levels)


# ---------------------------------------------------------------------------
# Main
# ---------------------------------------------------------------------------

if __name__ == "__main__":
    key = jax.random.PRNGKey(0)
    N, f, H, W = 2, 32, 16, 16      # batch, channels, spatial
    n_levels = 2                     # hourglass depth: 16 -> 8 -> 4

    pkey, xkey = jax.random.split(key)
    blocks = init_blocks(pkey, n_levels, f, increase=0)

    # PyTorch-style NCHW input; kernel runs channel-on-sublane / spatial-on-lane.
    x_nchw = jax.random.normal(xkey, (N, f, H, W), jnp.float32)

    out_nchw = hourglass_pallas(blocks, x_nchw, n_levels, images_per_step=1)
    out_nchw = jax.block_until_ready(out_nchw)
    assert out_nchw.shape == (N, f, H, W)

    x_nhwc = jnp.transpose(x_nchw, (0, 2, 3, 1))
    ref_nchw = jnp.transpose(ref_forward(blocks, x_nhwc, n_levels), (0, 3, 1, 2))

    # Tolerance accounts for bf16 MXU operands (f32 accumulation) vs. the
    # HIGHEST-precision f32 reference; pool/upsample are exact in the kernel.
    assert np.allclose(np.asarray(out_nchw), np.asarray(ref_nchw),
                       atol=3e-2, rtol=3e-2), "Pallas output mismatch vs ref"
    print("KERNEL_OK")
</pallas_src>

<mosaic_0001>
module attributes {stable_mosaic.version = 11 : i64} {
  func.func @probe(%arg0: memref<8x128xf32, #tpu.memory_space<vmem>>, %arg1: memref<8x128xf32, #tpu.memory_space<vmem>>) attributes {dimension_semantics = [], scalar_prefetch = 0 : i64, scratch_operands = 0 : i64, tpu.core_type = #tpu.core_type<tc>} {
    %c0 = arith.constant 0 : index
    %c0_0 = arith.constant 0 : index
    %0 = vector.load %arg0[%c0, %c0_0] : memref<8x128xf32, #tpu.memory_space<vmem>>, vector<8x128xf32>
    %c1_i32 = arith.constant 1 : i32
    %1 = tpu.dynamic_rotate %0 by %c1_i32 dim 1 : vector<8x128xf32>, i32 -> vector<8x128xf32>
    %c0_1 = arith.constant 0 : index
    %c0_2 = arith.constant 0 : index
    %2 = vector.load %arg1[%c0_1, %c0_2] : memref<8x128xf32, #tpu.memory_space<vmem>>, vector<8x128xf32>
    tpu.vector_store %arg1[%c0_1, %c0_2], %1 {strides = array<i32>} : memref<8x128xf32, #tpu.memory_space<vmem>>, vector<8x128xf32>,
    return
  }
}

</mosaic_0001>

<llo_original>
// kernel: tpu_custom_call.1
$region0: #{tpu_custom_call.1}
  #allocation0 [shape = 'u32[]', space=smem, size = 0x4, offset = 0x4, fixed_abs, tag = 'smem constant byte address 0x4 - core index']
  #allocation1 [shape = 'u32[72,128]{1,0:T(1,128)}', space=vmem, size = 0x9000, scoped, tag = 'internal scratch']
  %s0 = inlined_call_operand.hbm [shape: f32[8,128], index: 0, kind: input, shape index: {}]
  %s1 = inlined_call_operand.hbm [shape: f32[8,128], index: 1, kind: output, shape index: {}]
  %s2 = sld [smem:[#allocation0]]
  $region18: #{tpu_custom_call.1} parent=0
    _
  %s4 = ssub.s32 1, %s2
  %s5 = scalar_select 0, %s4, %s2
  $region1: #{tpu_custom_call.1} parent=0
    #allocation2 [shape = 'u8[4096]{0}', space=vmem, size = 0x1000, scoped, tag = 'input window, operand 0, single buffered']
    #allocation3 [shape = 's32[1]{0}', space=sflag, size = 0x4, scoped, tag = 'scoped memory for tpu_custom_call.1']
    #allocation4 [shape = 's32[1]{0}', space=sflag, size = 0x4, scoped, tag = 'scoped memory for tpu_custom_call.1']
    #allocation5 [shape = 'u8[4096]{0}', space=vmem, size = 0x1000, scoped, tag = 'output window, operand 0, single buffered']
    %6 = vsyncpa [#allocation3], 0
    %7 = vsyncpa [#allocation4], 0
    // Predicated region
    $region2: #{tpu_custom_call.1} parent=1 // pred_check
      _
    $region3: #{tpu_custom_call.1} parent=1 // pred_check_branch
      %9 = sbr.rel (0) target = $region5
    $region4: #{tpu_custom_call.1} parent=1 // pred_region
      %11 = vsyncadd [#allocation3], 0
      %s13 = sshll.u32 %s0, 4
      %s14 = int_to_ptr.hbm [resolvable:$true] %s13
      %s15 = sshll.u32 [#allocation2], 4
      %s16 = int_to_ptr.vmem [resolvable:$true] %s15
      %18 = dma.hbm_to_vmem [thread:$0]  %s14, 128, %s16, [#allocation3]
    $region5: #{tpu_custom_call.1} parent=1 // pred_fallthru
      _
    // Predicated region
    $region6: #{tpu_custom_call.1} parent=1 // pred_check
      _
    $region7: #{tpu_custom_call.1} parent=1 // pred_check_branch
      %20 = sbr.rel (0) target = $region9
    $region8: #{tpu_custom_call.1} parent=1 // pred_region
      %22 = dma.done [#allocation3], 128
    $region9: #{tpu_custom_call.1} parent=1 // pred_fallthru
      _
    %v23 = vld [vmem:[#allocation2] sm:$0xff]
    %24 = vrot.lane.b32.xlu0 %v23, 1
    %v25 = vpop.permute.xlu0 %24
    %26 = vst [vmem:[#allocation5] sm:$0xff] %v25
    // Predicated region
    $region10: #{tpu_custom_call.1} parent=1 // pred_check
      _
    $region11: #{tpu_custom_call.1} parent=1 // pred_check_branch
      %28 = sbr.rel (0) target = $region13
    $region12: #{tpu_custom_call.1} parent=1 // pred_region
      %30 = vsyncadd [#allocation4], 0
      %s32 = sshll.u32 [#allocation5], 4
      %s33 = int_to_ptr.vmem [resolvable:$true] %s32
      %s34 = sshll.u32 %s1, 4
      %s35 = int_to_ptr.hbm [resolvable:$true] %s34
      %37 = dma.vmem_to_hbm [thread:$0]  %s33, 128, %s35, [#allocation4]
    $region13: #{tpu_custom_call.1} parent=1 // pred_fallthru
      _
    // Predicated region
    $region14: #{tpu_custom_call.1} parent=1 // pred_check
      _
    $region15: #{tpu_custom_call.1} parent=1 // pred_check_branch
      %39 = sbr.rel (0) target = $region17
    $region16: #{tpu_custom_call.1} parent=1 // pred_region
      %41 = dma.done [#allocation4], 128
    $region17: #{tpu_custom_call.1} parent=1 // pred_fallthru
      _
    %42 = vsyncpa [#allocation3], 1
    %43 = vsyncpa [#allocation4], 1

</llo_original>
